<compile_context>
chip_gen: v5e
topology: v5e:2x2
jax: 0.10.0
libtpu: 0.0.40
codegen_flags: <defaults>
</compile_context>

<pallas_src>
import functools

import jax
import jax.numpy as jnp
from jax.experimental import pallas as pl
from jax.experimental.pallas import tpu as pltpu


def _cam_kernel(l_ref, w_ref, o_ref, *, num_classes, num_channels, c_chunk):
    """One grid step: a tile of Bt samples against the full classifier head.

    l_ref: [Bt, C, S]  activations (original dtype), S = H*W on the lane axis
    w_ref: [K,  C, S]  classifier weights (original dtype), VMEM-resident
    o_ref: [Bt, 1, S]  per-sample class-averaged attention map
    """
    bt = l_ref.shape[0]
    s = l_ref.shape[-1]

    # cam[b, k, s] = mean_c( w[k, c, s] * l[b, c, s] ), accumulated over channel
    # chunks so the live f32 product [Bt, K, chunk, S] stays in vregs.
    acc = jnp.zeros((bt, num_classes, s), jnp.float32)
    for c0 in range(0, num_channels, c_chunk):
        c1 = min(num_channels, c0 + c_chunk)
        lc = l_ref[:, c0:c1, :].astype(jnp.float32)        # [Bt, cc, S]
        wc = w_ref[:, c0:c1, :].astype(jnp.float32)        # [K,  cc, S]
        acc = acc + jnp.sum(wc[None, :, :, :] * lc[:, None, :, :], axis=2)
    cam = acc * jnp.float32(1.0 / num_channels)            # [Bt, K, S]

    # Per-(sample, class) spatial normalization, exactly as in PyTorch:
    # no epsilon, so a spatially constant map produces NaN (0/0) like torch.
    cmin = jnp.min(cam, axis=-1, keepdims=True)            # [Bt, K, 1]
    cam = cam - cmin
    cmax = jnp.max(cam, axis=-1, keepdims=True)            # [Bt, K, 1]
    cam = cam * pl.reciprocal(cmax)                        # Bt*K recips + VPU mul

    mean_cam = jnp.sum(cam, axis=1) * jnp.float32(1.0 / num_classes)   # [Bt, S]
    o_ref[...] = mean_cam[:, None, :].astype(o_ref.dtype)


def _pick_batch_tile(n, max_tile=8):
    """Largest divisor of n that is <= max_tile, preferring >=2 grid steps."""
    cap = min(max_tile, n if n == 1 else max(1, n // 2))
    bt = 1
    for d in range(1, cap + 1):
        if n % d == 0:
            bt = d
    return bt


def _pick_channel_chunk(c, bt, classes, s, budget_bytes=64 * 1024):
    """Channel chunk keeping the f32 product [bt, classes, chunk, s] ~<= budget."""
    per_channel = max(1, bt * classes * s * 4)
    chunk = max(1, budget_bytes // per_channel)
    if chunk >= 8:
        chunk = (chunk // 8) * 8           # sublane-aligned static slice starts
    return int(min(c, chunk))


def spatial_attention_block_p(l, w, classes):
    """SpatialAttentionBlock_P.forward.  l: [N,C,H,W], w: [classes, C*H*W] -> [N,1,H,W]."""
    n, c, h, wd = l.shape
    s = h * wd
    assert w.shape == (classes, c * s), f"unexpected weight shape {w.shape}"

    # Ship inputs in their original dtype; these reshapes are metadata-only
    # (contiguous), so there is no extra HBM pass before the kernel.
    l2 = l.reshape(n, c, s)
    w2 = w.reshape(classes, c, s)   # assumes torch's [C, H, W] per-class layout

    bt = _pick_batch_tile(n)
    c_chunk = _pick_channel_chunk(c, bt, classes, s)
    out_dtype = l.dtype

    # VMEM budget: activation/output tiles are double-buffered by the pipeline;
    # the weight slab has a constant index_map but is also allocated x2 by default.
    need = (2 * bt * c * s * l.dtype.itemsize
            + 2 * classes * c * s * w.dtype.itemsize
            + 2 * bt * s * jnp.dtype(out_dtype).itemsize
            + 4 * bt * classes * s * 4          # f32 acc / cam / product headroom
            + (2 << 20))                        # slack for compiler temporaries
    vmem_limit = int(min(64 << 20, max(need, 32 << 20)))   # stay inside v7x's 64 MiB
    # TODO(synk): for heads where classes*C*S*itemsize exceeds ~1/4 of VMEM
    # (especially v7x's 64 MiB), add class/channel grid axes ("arbitrary") with
    # a [K_tile, S] scratch accumulator and/or single-buffer the weight slab
    # (pipeline_mode=pl.Buffered(1)) instead of keeping it monolithically resident.

    kernel = functools.partial(_cam_kernel, num_classes=classes,
                               num_channels=c, c_chunk=c_chunk)
    out = pl.pallas_call(
        kernel,
        out_shape=jax.ShapeDtypeStruct((n, 1, s), out_dtype),
        grid=(n // bt,),
        in_specs=[
            pl.BlockSpec((bt, c, s), lambda i: (i, 0, 0)),          # activations
            pl.BlockSpec((classes, c, s), lambda i: (0, 0, 0)),     # weights (resident)
        ],
        out_specs=pl.BlockSpec((bt, 1, s), lambda i: (i, 0, 0)),
        compiler_params=pltpu.CompilerParams(
            dimension_semantics=("parallel",),
            vmem_limit_bytes=vmem_limit,
        ),
    )(l2, w2)
    return out.reshape(n, 1, h, wd)


def _reference(l, w, classes):
    # Pure-JAX mirror of the PyTorch forward, for correctness checking.
    n, c, h, wd = l.shape
    wr = w.reshape(classes, 1, c, h, wd).astype(jnp.float32)
    cam = (wr * l[None].astype(jnp.float32)).mean(axis=2)          # [K, N, H, W]
    cam = cam - cam.min(axis=(2, 3), keepdims=True)
    cam = cam / cam.max(axis=(2, 3), keepdims=True)
    return cam.mean(axis=0)[:, None]                               # [N, 1, H, W]


if __name__ == "__main__":
    keys = jax.random.split(jax.random.PRNGKey(0), 6)
    fwd = jax.jit(spatial_attention_block_p, static_argnums=2)

    # 1) Main shape: 8 samples -> 2 "parallel" grid steps of 4-sample tiles
    #    (megacore-friendly on v7x), S = 256 lanes (lane-dense), C = 4.
    N, C, H, W_, K_ = 8, 4, 16, 16, 3
    l = jax.random.normal(keys[0], (N, C, H, W_), jnp.float32)
    w = jax.random.normal(keys[1], (K_, C * H * W_), jnp.float32)
    out = fwd(l, w, K_)
    jax.block_until_ready(out)
    assert out.shape == (N, 1, H, W_)
    err = float(jnp.max(jnp.abs(out.astype(jnp.float32) - _reference(l, w, K_))))
    if not err < 1e-4:
        raise AssertionError(f"mismatch vs reference (8x4x16x16): {err}")

    # 2) Spatial size not a multiple of 128 (S = 25): full-extent lane block,
    #    no wrapper padding and no in-kernel masking needed.
    N2, C2, H2, K2 = 4, 32, 5, 5
    l2 = jax.random.normal(keys[2], (N2, C2, H2, H2), jnp.float32)
    w2 = jax.random.normal(keys[3], (K2, C2 * H2 * H2), jnp.float32)
    out2 = fwd(l2, w2, K2)
    jax.block_until_ready(out2)
    err2 = float(jnp.max(jnp.abs(out2.astype(jnp.float32) - _reference(l2, w2, K2))))
    if not err2 < 1e-4:
        raise AssertionError(f"mismatch vs reference (4x32x5x5): {err2}")

    # 3) Larger channel count -> exercises the channel-chunked accumulation path.
    N3, C3, H3, K3 = 4, 64, 8, 6
    l3 = jax.random.normal(keys[4], (N3, C3, H3, H3), jnp.float32)
    w3 = jax.random.normal(keys[5], (K3, C3 * H3 * H3), jnp.float32)
    out3 = fwd(l3, w3, K3)
    jax.block_until_ready(out3)
    err3 = float(jnp.max(jnp.abs(out3.astype(jnp.float32) - _reference(l3, w3, K3))))
    if not err3 < 1e-4:
        raise AssertionError(f"mismatch vs reference (4x64x8x8): {err3}")

    print("KERNEL_OK")
</pallas_src>

<mosaic_0001>
module attributes {stable_mosaic.version = 11 : i64} {
  func.func @_cam_kernel(%arg0: i32, %arg1: memref<4x4x256xf32, #tpu.memory_space<vmem>>, %arg2: memref<3x4x256xf32, #tpu.memory_space<vmem>>, %arg3: memref<4x1x256xf32, #tpu.memory_space<vmem>>) attributes {dimension_semantics = [#tpu.dimension_semantics<parallel>], iteration_bounds = array<i64: 2>, scalar_prefetch = 0 : i64, scratch_operands = 0 : i64, tpu.core_type = #tpu.core_type<tc>, window_params = [{transform_indices = @transform_0, window_bounds = array<i64: 4, 4, 256>}, {pipeline_mode = #tpu.pipeline_mode<synchronous>, transform_indices = @transform_1, window_bounds = array<i64: 3, 4, 256>}, {transform_indices = @transform_2, window_bounds = array<i64: 4, 1, 256>}]} {
    %cst = arith.constant 0.000000e+00 : f32
    %0 = vector.broadcast %cst : f32 to vector<4x3x256xf32>
    %c0 = arith.constant 0 : index
    %c0_0 = arith.constant 0 : index
    %c0_1 = arith.constant 0 : index
    %1 = vector.load %arg1[%c0, %c0_0, %c0_1] : memref<4x4x256xf32, #tpu.memory_space<vmem>>, vector<4x4x256xf32>
    %c0_2 = arith.constant 0 : index
    %c0_3 = arith.constant 0 : index
    %c0_4 = arith.constant 0 : index
    %2 = vector.load %arg2[%c0_2, %c0_3, %c0_4] : memref<3x4x256xf32, #tpu.memory_space<vmem>>, vector<3x4x256xf32>
    %3 = vector.shape_cast %2 : vector<3x4x256xf32> to vector<1x3x4x256xf32>
    %4 = vector.shape_cast %1 : vector<4x4x256xf32> to vector<4x1x4x256xf32>
    %5 = vector.broadcast %3 : vector<1x3x4x256xf32> to vector<4x3x4x256xf32>
    %6 = vector.broadcast %4 : vector<4x1x4x256xf32> to vector<4x3x4x256xf32>
    %7 = arith.mulf %5, %6 : vector<4x3x4x256xf32>
    %cst_5 = arith.constant dense<0.000000e+00> : vector<4x3x256xf32>
    %8 = vector.multi_reduction <add>, %7, %cst_5 [2] : vector<4x3x4x256xf32> to vector<4x3x256xf32>
    %9 = arith.addf %0, %8 : vector<4x3x256xf32>
    %cst_6 = arith.constant 2.500000e-01 : f32
    %10 = vector.broadcast %cst_6 : f32 to vector<4x3x256xf32>
    %11 = arith.mulf %9, %10 : vector<4x3x256xf32>
    %cst_7 = arith.constant dense<0x7F800000> : vector<4x3xf32>
    %12 = vector.multi_reduction <minimumf>, %11, %cst_7 [2] : vector<4x3x256xf32> to vector<4x3xf32>
    %13 = vector.shape_cast %12 : vector<4x3xf32> to vector<4x3x1xf32>
    %14 = vector.broadcast %13 : vector<4x3x1xf32> to vector<4x3x256xf32>
    %15 = arith.subf %11, %14 : vector<4x3x256xf32>
    %cst_8 = arith.constant dense<0xFF800000> : vector<4x3xf32>
    %16 = vector.multi_reduction <maximumf>, %15, %cst_8 [2] : vector<4x3x256xf32> to vector<4x3xf32>
    %17 = vector.shape_cast %16 : vector<4x3xf32> to vector<4x3x1xf32>
    %18 = tpu.reciprocal %17 : vector<4x3x1xf32> -> vector<4x3x1xf32>
    %19 = vector.broadcast %18 : vector<4x3x1xf32> to vector<4x3x256xf32>
    %20 = arith.mulf %15, %19 : vector<4x3x256xf32>
    %cst_9 = arith.constant dense<0.000000e+00> : vector<4x256xf32>
    %21 = vector.multi_reduction <add>, %20, %cst_9 [1] : vector<4x3x256xf32> to vector<4x256xf32>
    %cst_10 = arith.constant 0.333333343 : f32
    %22 = vector.broadcast %cst_10 : f32 to vector<4x256xf32>
    %23 = arith.mulf %21, %22 : vector<4x256xf32>
    %24 = vector.shape_cast %23 : vector<4x256xf32> to vector<4x1x256xf32>
    %c0_11 = arith.constant 0 : index
    %c0_12 = arith.constant 0 : index
    %c0_13 = arith.constant 0 : index
    %25 = vector.load %arg3[%c0_11, %c0_12, %c0_13] : memref<4x1x256xf32, #tpu.memory_space<vmem>>, vector<4x1x256xf32>
    tpu.vector_store %arg3[%c0_11, %c0_12, %c0_13], %24 {strides = array<i32>} : memref<4x1x256xf32, #tpu.memory_space<vmem>>, vector<4x1x256xf32>,
    return
  }
  func.func @transform_0(%arg0: i32) -> (i32, i32, i32) {
    %c0_i32 = arith.constant 0 : i32
    %c0_i32_0 = arith.constant 0 : i32
    %c0_i32_1 = arith.constant 0 : i32
    return %arg0, %c0_i32, %c0_i32_0 : i32, i32, i32
  }
  func.func @transform_1(%arg0: i32) -> (i32, i32, i32) {
    %c0_i32 = arith.constant 0 : i32
    %c0_i32_0 = arith.constant 0 : i32
    %c0_i32_1 = arith.constant 0 : i32
    %c0_i32_2 = arith.constant 0 : i32
    return %c0_i32, %c0_i32_0, %c0_i32_1 : i32, i32, i32
  }
  func.func @transform_2(%arg0: i32) -> (i32, i32, i32) {
    %c0_i32 = arith.constant 0 : i32
    %c0_i32_0 = arith.constant 0 : i32
    %c0_i32_1 = arith.constant 0 : i32
    return %arg0, %c0_i32, %c0_i32_0 : i32, i32, i32
  }
}

</mosaic_0001>

<llo_original>
// kernel: spatial_attention_block_p.1
$region0: #{spatial_attention_block_p.1}
  #allocation0 [shape = 'u32[]', space=smem, size = 0x4, offset = 0x4, fixed_abs, tag = 'smem constant byte address 0x4 - core index']
  #allocation1 [shape = 'u32[72,128]{1,0:T(1,128)}', space=vmem, size = 0x9000, scoped, tag = 'internal scratch']
  %s0 = inlined_call_operand.vmem [shape: f32[8,4,256], index: 0, kind: input, shape index: {}]
  %s1 = inlined_call_operand.vmem [shape: f32[3,4,256], index: 1, kind: input, shape index: {}]
  %s2 = inlined_call_operand.vmem [shape: f32[8,1,256], index: 2, kind: output, shape index: {}]
  %s3 = sld [smem:[#allocation0]]
  $region41: #{spatial_attention_block_p.1} parent=0
    _
  %s5 = ssub.s32 1, %s3
  %s6 = scalar_select 0, %s5, %s3
  loop: start=0, step=1, limit=4
  $region2: #{spatial_attention_block_p.1} parent=0 // loop_pre_header
    _
  $region3: #{spatial_attention_block_p.1} parent=0 // loop_header
    %s8 = sphi 0, %s12
    %p9 = scmp.ge.s32.totalorder %s8, 4
    %s18 = sphi 0, %s20
    %s21 = sphi 0, %s18
    %s22 = sphi 0, %s21
    %s38 = sphi 0, %s22
    %s42 = sphi 0, %s42
    %s44 = sphi 0, %s42
    %s45 = sphi 0, %s44
    %s59 = sphi 0, %s45
    %s65 = sphi 0, %s67
    %s68 = sphi 0, %s65
    %s69 = sphi 0, %s68
    %s85 = sphi 0, %s69
  $region4: #{spatial_attention_block_p.1} parent=0 // loop_header_branch
    %11 = sbr.rel (%p9) target = $region8
  $region5: #{spatial_attention_block_p.1} parent=0 // loop_body
    %s13 = ssub.s32 %s8, 1
    %s14 = ssub.s32 %s8, 2
    %s15 = sadd.s32 %s8, 1
    %s16 = ssub.s32 %s8, %s15
    %p17 = scmp.eq.s32.totalorder %s16, 0
    %s19 = sadd.s32 %s18, 1
    %s20 = scalar_select %p17, %s18, %s19
    %p23 = pneg %p17
    %p24 = scmp.eq.s32.totalorder %s8, 1
    %p25 = por %p23, %p24
    %p26 = scmp.ne.s32.totalorder %s18, %s21
    %p27 = scmp.eq.s32.totalorder %s8, 0
    %p28 = por %p26, %p27
    %p29 = scmp.ne.s32.totalorder %s18, %s21
    %p30 = scmp.eq.s32.totalorder %s13, 1
    %p31 = por %p29, %p30
    %p32 = scmp.ne.s32.totalorder %s21, %s22
    %p33 = scmp.eq.s32.totalorder %s13, 0
    %p34 = por %p32, %p33
    %p35 = scmp.ne.s32.totalorder %s21, %s22
    %p36 = scmp.eq.s32.totalorder %s14, 1
    %p37 = por %p35, %p36
    %p39 = scmp.ne.s32.totalorder %s22, %s38
    %p40 = scmp.eq.s32.totalorder %s14, 0
    %p41 = por %p39, %p40
    %s43 = sadd.s32 %s42, 1
    %p46 = scmp.eq.s32.totalorder %s8, 1
    %p47 = scmp.ne.s32.totalorder %s42, %s44
    %p48 = scmp.eq.s32.totalorder %s8, 0
    %p49 = por %p47, %p48
    %p50 = scmp.ne.s32.totalorder %s42, %s44
    %p51 = scmp.eq.s32.totalorder %s13, 1
    %p52 = por %p50, %p51
    %p53 = scmp.ne.s32.totalorder %s44, %s45
    %p54 = scmp.eq.s32.totalorder %s13, 0
    %p55 = por %p53, %p54
    %p56 = scmp.ne.s32.totalorder %s44, %s45
    %p57 = scmp.eq.s32.totalorder %s14, 1
    %p58 = por %p56, %p57
    %p60 = scmp.ne.s32.totalorder %s45, %s59
    %p61 = scmp.eq.s32.totalorder %s14, 0
    %p62 = por %p60, %p61
    %s63 = ssub.s32 %s8, %s15
    %p64 = scmp.eq.s32.totalorder %s63, 0
    %s66 = sadd.s32 %s65, 1
    %s67 = scalar_select %p64, %s65, %s66
    %p70 = pneg %p64
    %p71 = scmp.eq.s32.totalorder %s8, 1
    %p72 = por %p70, %p71
    %p73 = scmp.ne.s32.totalorder %s65, %s68
    %p74 = scmp.eq.s32.totalorder %s8, 0
    %p75 = por %p73, %p74
    %p76 = scmp.ne.s32.totalorder %s65, %s68
    %p77 = scmp.eq.s32.totalorder %s13, 1
    %p78 = por %p76, %p77
    %p79 = scmp.ne.s32.totalorder %s68, %s69
    %p80 = scmp.eq.s32.totalorder %s13, 0
    %p81 = por %p79, %p80
    %p82 = scmp.ne.s32.totalorder %s68, %s69
    %p83 = scmp.eq.s32.totalorder %s14, 1
    %p84 = por %p82, %p83
    %p86 = scmp.ne.s32.totalorder %s69, %s85
    %p87 = scmp.eq.s32.totalorder %s14, 0
    %p88 = por %p86, %p87
    %p89 = scmp.le.s32.totalorder 1, %s8
    %p90 = scmp.lt.s32.totalorder %s8, 3
    %p91 = pnand %p89, %p90
    %p92 = pneg %p91
    // Predicated region
    $region9: #{spatial_attention_block_p.1} parent=5 // pred_check
      _
    $region10: #{spatial_attention_block_p.1} parent=5 // pred_check_branch
      %94 = sbr.rel (%p91) target = $region12
    $region11: #{spatial_attention_block_p.1} parent=5 // pred_region
      %s95 = ssub.s32 %s8, 1
      // Predicated region
      $region13: #{spatial_attention_block_p.1} parent=11 // pred_check
        %p96 = pneg %p55
      $region14: #{spatial_attention_block_p.1} parent=11 // pred_check_branch
        %98 = sbr.rel (%p96) target = $region16
      $region15: #{spatial_attention_block_p.1} parent=11 // pred_region
        _
      $region16: #{spatial_attention_block_p.1} parent=11 // pred_fallthru
        _
    $region12: #{spatial_attention_block_p.1} parent=5 // pred_fallthru
      _
    %p99 = scmp.lt.s32.totalorder %s8, 2
    // Predicated region
    $region17: #{spatial_attention_block_p.1} parent=5 // pred_check
      %p100 = pneg %p99
    $region18: #{spatial_attention_block_p.1} parent=5 // pred_check_branch
      %102 = sbr.rel (%p100) target = $region20
    $region19: #{spatial_attention_block_p.1} parent=5 // pred_region
      // Predicated region
      $region21: #{spatial_attention_block_p.1} parent=19 // pred_check
        %p103 = pneg %p28
      $region22: #{spatial_attention_block_p.1} parent=19 // pred_check_branch
        %105 = sbr.rel (%p103) target = $region24
      $region23: #{spatial_attention_block_p.1} parent=19 // pred_region
        %s106 = smul.u32 4, %s8
        %p107 = scmp.lt.s32.totalorder %s106, 7
        %s108 = scalar_select %p107, %s106, 7
        %s109 = smul.addr %s108, 2
        %s110 = smul.addr %s109, 4
        %s111 = scalar_lea.vmem %s0, %s110
        %s112 = smul.u32 4, %s8
      $region24: #{spatial_attention_block_p.1} parent=19 // pred_fallthru
        _
    $region20: #{spatial_attention_block_p.1} parent=5 // pred_fallthru
      _
    %p113 = scmp.le.s32.totalorder 1, %s8
    %p114 = scmp.lt.s32.totalorder %s8, 3
    %p115 = pnand %p113, %p114
    %p116 = pneg %p115
    // Predicated region
    $region25: #{spatial_attention_block_p.1} parent=5 // pred_check
      _
    $region26: #{spatial_attention_block_p.1} parent=5 // pred_check_branch
      %118 = sbr.rel (%p115) target = $region28
    $region27: #{spatial_attention_block_p.1} parent=5 // pred_region
      %s119 = ssub.s32 %s8, 1
      %s120 = smul.u32 4, %s13
      %p121 = scmp.lt.s32.totalorder %s120, 7
      %s122 = scalar_select %p121, %s120, 7
      %s123 = smul.addr %s122, 2
      %s124 = smul.addr %s123, 4
      %s125 = scalar_lea.vmem %s0, %s124
      %p126 = pneg %p34
      %p127 = pneg %p31
      %p128 = pneg %p55
      %p129 = pneg %p52
      %p130 = pneg %p81
      %p131 = pneg %p78
      %s132 = smul.u32 4, %s13
      %p133 = scmp.lt.s32.totalorder %s132, 7
      %s134 = scalar_select %p133, %s132, 7
      %s135 = smul.addr %s134, 2
      %s136 = scalar_lea.vmem %s2, %s135
      %s137 = smul.u32 4, %s13
      %p138 = scmp.lt.s32.totalorder %s137, 7
      %s139 = scalar_select %p138, %s137, 7
      %s140 = smul.addr %s139, 2
      %s141 = smul.addr %s140, 4
      %s142 = scalar_lea.vmem %s0, %s141
      %s143 = smul.u32 4, %s13
      %s144 = smul.u32 4, %s13
      %p145 = scmp.lt.s32.totalorder %s144, 7
      %s146 = scalar_select %p145, %s144, 7
      %s147 = smul.addr %s146, 2
      %s148 = scalar_lea.vmem %s2, %s147
      %s149 = smul.u32 4, %s13
      %v150 = vld [vmem:[%s142] sm:$0xff]
      %v151 = vld [vmem:[%s142 + $0x8] sm:$0xff]
      %v152 = vld [vmem:[%s142 + $0x10] sm:$0xff]
      %v153 = vld [vmem:[%s142 + $0x18] sm:$0xff]
      %v154 = vld [vmem:[%s1] sm:$0xff]
      %v155 = vld [vmem:[%s1 + $0x8] sm:$0xff]
      %v156 = vld [vmem:[%s1 + $0x10] sm:$0xff]
      %v157 = vmul.f32 %v154, %v150
      %v158 = vmul.f32 %v155, %v150
      %v159 = vmul.f32 %v156, %v150
      %v160 = vmul.f32 %v154, %v151
      %v161 = vmul.f32 %v155, %v151
      %v162 = vmul.f32 %v156, %v151
      %v163 = vmul.f32 %v154, %v152
      %v164 = vmul.f32 %v155, %v152
      %v165 = vmul.f32 %v156, %v152
      %v166 = vmul.f32 %v154, %v153
      %v167 = vmul.f32 %v155, %v153
      %v168 = vmul.f32 %v156, %v153
      %181 = vst [vmem:[#allocation1] ss:$2 sm:$0xff] %v157
      %v182 = vld.sshfl [vmem:[#allocation1] sm:$0xff pattern:$0x75316420]
      %v183 = vld.sshfl [vmem:[#allocation1 + $0x8] sm:$0xff pattern:$0x75316420]
      %s184 = scalar_lea.vmem [#allocation1], 16
      %185 = vst [vmem:[%s184] ss:$2 sm:$0xff] %v158
      %v186 = vld.sshfl [vmem:[#allocation1 + $0x10] sm:$0xff pattern:$0x75316420]
      %v187 = vld.sshfl [vmem:[#allocation1 + $0x18] sm:$0xff pattern:$0x75316420]
      %s188 = scalar_lea.vmem [#allocation1], 32
      %189 = vst [vmem:[%s188] ss:$2 sm:$0xff] %v159
      %v190 = vld.sshfl [vmem:[#allocation1 + $0x20] sm:$0xff pattern:$0x75316420]
      %v191 = vld.sshfl [vmem:[#allocation1 + $0x28] sm:$0xff pattern:$0x75316420]
      %s192 = scalar_lea.vmem [#allocation1], 48
      %193 = vst [vmem:[%s192] ss:$2 sm:$0xff] %v160
      %v194 = vld.sshfl [vmem:[#allocation1 + $0x30] sm:$0xff pattern:$0x75316420]
      %v195 = vld.sshfl [vmem:[#allocation1 + $0x38] sm:$0xff pattern:$0x75316420]
      %196 = vst [vmem:[#allocation1] ss:$2 sm:$0xff] %v161
      %v197 = vld.sshfl [vmem:[#allocation1] sm:$0xff pattern:$0x75316420]
      %v198 = vld.sshfl [vmem:[#allocation1 + $0x8] sm:$0xff pattern:$0x75316420]
      %199 = vst [vmem:[%s184] ss:$2 sm:$0xff] %v162
      %v200 = vld.sshfl [vmem:[#allocation1 + $0x10] sm:$0xff pattern:$0x75316420]
      %v201 = vld.sshfl [vmem:[#allocation1 + $0x18] sm:$0xff pattern:$0x75316420]
      %202 = vst [vmem:[%s188] ss:$2 sm:$0xff] %v163
      %v203 = vld.sshfl [vmem:[#allocation1 + $0x20] sm:$0xff pattern:$0x75316420]
      %v204 = vld.sshfl [vmem:[#allocation1 + $0x28] sm:$0xff pattern:$0x75316420]
      %205 = vst [vmem:[%s192] ss:$2 sm:$0xff] %v164
      %v206 = vld.sshfl [vmem:[#allocation1 + $0x30] sm:$0xff pattern:$0x75316420]
      %v207 = vld.sshfl [vmem:[#allocation1 + $0x38] sm:$0xff pattern:$0x75316420]
      %208 = vst [vmem:[#allocation1] ss:$2 sm:$0xff] %v165
      %v209 = vld.sshfl [vmem:[#allocation1] sm:$0xff pattern:$0x75316420]
      %v210 = vld.sshfl [vmem:[#allocation1 + $0x8] sm:$0xff pattern:$0x75316420]
      %211 = vst [vmem:[%s184] ss:$2 sm:$0xff] %v166
      %v212 = vld.sshfl [vmem:[#allocation1 + $0x10] sm:$0xff pattern:$0x75316420]
      %v213 = vld.sshfl [vmem:[#allocation1 + $0x18] sm:$0xff pattern:$0x75316420]
      %214 = vst [vmem:[%s188] ss:$2 sm:$0xff] %v167
      %v215 = vld.sshfl [vmem:[#allocation1 + $0x20] sm:$0xff pattern:$0x75316420]
      %v216 = vld.sshfl [vmem:[#allocation1 + $0x28] sm:$0xff pattern:$0x75316420]
      %217 = vst [vmem:[%s192] ss:$2 sm:$0xff] %v168
      %v218 = vld.sshfl [vmem:[#allocation1 + $0x30] sm:$0xff pattern:$0x75316420]
      %v219 = vld.sshfl [vmem:[#allocation1 + $0x38] sm:$0xff pattern:$0x75316420]
      %vm244 = vcmask 1043456
      %v245 = vsel %vm244, %v182, 0.0
      %v246 = vrot.slane %v245, 4
      %v247 = vadd.f32 %v245, %v246
      %v248 = vrot.slane %v247, 2
      %v249 = vadd.f32 %v247, %v248
      %v250 = vrot.slane %v249, 1
      %v251 = vadd.f32 %v249, %v250
      %v252 = vsel %vm244, %v183, 0.0
      %v253 = vrot.slane %v252, 4
      %v254 = vadd.f32 %v252, %v253
      %v255 = vrot.slane %v254, 2
      %v256 = vadd.f32 %v254, %v255
      %v257 = vrot.slane %v256, 1
      %v258 = vadd.f32 %v256, %v257
      %v259 = vsel %vm244, %v186, 0.0
      %v260 = vrot.slane %v259, 4
      %v261 = vadd.f32 %v259, %v260
      %v262 = vrot.slane %v261, 2
      %v263 = vadd.f32 %v261, %v262
      %v264 = vrot.slane %v263, 1
      %v265 = vadd.f32 %v263, %v264
      %v266 = vsel %vm244, %v187, 0.0
      %v267 = vrot.slane %v266, 4
      %v268 = vadd.f32 %v266, %v267
      %v269 = vrot.slane %v268, 2
      %v270 = vadd.f32 %v268, %v269
      %v271 = vrot.slane %v270, 1
      %v272 = vadd.f32 %v270, %v271
      %v273 = vsel %vm244, %v190, 0.0
      %v274 = vrot.slane %v273, 4
      %v275 = vadd.f32 %v273, %v274
      %v276 = vrot.slane %v275, 2
      %v277 = vadd.f32 %v275, %v276
      %v278 = vrot.slane %v277, 1
      %v279 = vadd.f32 %v277, %v278
      %v280 = vsel %vm244, %v191, 0.0
      %v281 = vrot.slane %v280, 4
      %v282 = vadd.f32 %v280, %v281
      %v283 = vrot.slane %v282, 2
      %v284 = vadd.f32 %v282, %v283
      %v285 = vrot.slane %v284, 1
      %v286 = vadd.f32 %v284, %v285
      %v287 = vsel %vm244, %v194, 0.0
      %v288 = vrot.slane %v287, 4
      %v289 = vadd.f32 %v287, %v288
      %v290 = vrot.slane %v289, 2
      %v291 = vadd.f32 %v289, %v290
      %v292 = vrot.slane %v291, 1
      %v293 = vadd.f32 %v291, %v292
      %v294 = vsel %vm244, %v195, 0.0
      %v295 = vrot.slane %v294, 4
      %v296 = vadd.f32 %v294, %v295
      %v297 = vrot.slane %v296, 2
      %v298 = vadd.f32 %v296, %v297
      %v299 = vrot.slane %v298, 1
      %v300 = vadd.f32 %v298, %v299
      %v301 = vsel %vm244, %v197, 0.0
      %v302 = vrot.slane %v301, 4
      %v303 = vadd.f32 %v301, %v302
      %v304 = vrot.slane %v303, 2
      %v305 = vadd.f32 %v303, %v304
      %v306 = vrot.slane %v305, 1
      %v307 = vadd.f32 %v305, %v306
      %v308 = vsel %vm244, %v198, 0.0
      %v309 = vrot.slane %v308, 4
      %v310 = vadd.f32 %v308, %v309
      %v311 = vrot.slane %v310, 2
      %v312 = vadd.f32 %v310, %v311
      %v313 = vrot.slane %v312, 1
      %v314 = vadd.f32 %v312, %v313
      %v315 = vsel %vm244, %v200, 0.0
      %v316 = vrot.slane %v315, 4
      %v317 = vadd.f32 %v315, %v316
      %v318 = vrot.slane %v317, 2
      %v319 = vadd.f32 %v317, %v318
      %v320 = vrot.slane %v319, 1
      %v321 = vadd.f32 %v319, %v320
      %v322 = vsel %vm244, %v201, 0.0
      %v323 = vrot.slane %v322, 4
      %v324 = vadd.f32 %v322, %v323
      %v325 = vrot.slane %v324, 2
      %v326 = vadd.f32 %v324, %v325
      %v327 = vrot.slane %v326, 1
      %v328 = vadd.f32 %v326, %v327
      %v329 = vsel %vm244, %v203, 0.0
      %v330 = vrot.slane %v329, 4
      %v331 = vadd.f32 %v329, %v330
      %v332 = vrot.slane %v331, 2
      %v333 = vadd.f32 %v331, %v332
      %v334 = vrot.slane %v333, 1
      %v335 = vadd.f32 %v333, %v334
      %v336 = vsel %vm244, %v204, 0.0
      %v337 = vrot.slane %v336, 4
      %v338 = vadd.f32 %v336, %v337
      %v339 = vrot.slane %v338, 2
      %v340 = vadd.f32 %v338, %v339
      %v341 = vrot.slane %v340, 1
      %v342 = vadd.f32 %v340, %v341
      %v343 = vsel %vm244, %v206, 0.0
      %v344 = vrot.slane %v343, 4
      %v345 = vadd.f32 %v343, %v344
      %v346 = vrot.slane %v345, 2
      %v347 = vadd.f32 %v345, %v346
      %v348 = vrot.slane %v347, 1
      %v349 = vadd.f32 %v347, %v348
      %v350 = vsel %vm244, %v207, 0.0
      %v351 = vrot.slane %v350, 4
      %v352 = vadd.f32 %v350, %v351
      %v353 = vrot.slane %v352, 2
      %v354 = vadd.f32 %v352, %v353
      %v355 = vrot.slane %v354, 1
      %v356 = vadd.f32 %v354, %v355
      %v357 = vsel %vm244, %v209, 0.0
      %v358 = vrot.slane %v357, 4
      %v359 = vadd.f32 %v357, %v358
      %v360 = vrot.slane %v359, 2
      %v361 = vadd.f32 %v359, %v360
      %v362 = vrot.slane %v361, 1
      %v363 = vadd.f32 %v361, %v362
      %v364 = vsel %vm244, %v210, 0.0
      %v365 = vrot.slane %v364, 4
      %v366 = vadd.f32 %v364, %v365
      %v367 = vrot.slane %v366, 2
      %v368 = vadd.f32 %v366, %v367
      %v369 = vrot.slane %v368, 1
      %v370 = vadd.f32 %v368, %v369
      %v371 = vsel %vm244, %v212, 0.0
      %v372 = vrot.slane %v371, 4
      %v373 = vadd.f32 %v371, %v372
      %v374 = vrot.slane %v373, 2
      %v375 = vadd.f32 %v373, %v374
      %v376 = vrot.slane %v375, 1
      %v377 = vadd.f32 %v375, %v376
      %v378 = vsel %vm244, %v213, 0.0
      %v379 = vrot.slane %v378, 4
      %v380 = vadd.f32 %v378, %v379
      %v381 = vrot.slane %v380, 2
      %v382 = vadd.f32 %v380, %v381
      %v383 = vrot.slane %v382, 1
      %v384 = vadd.f32 %v382, %v383
      %v385 = vsel %vm244, %v215, 0.0
      %v386 = vrot.slane %v385, 4
      %v387 = vadd.f32 %v385, %v386
      %v388 = vrot.slane %v387, 2
      %v389 = vadd.f32 %v387, %v388
      %v390 = vrot.slane %v389, 1
      %v391 = vadd.f32 %v389, %v390
      %v392 = vsel %vm244, %v216, 0.0
      %v393 = vrot.slane %v392, 4
      %v394 = vadd.f32 %v392, %v393
      %v395 = vrot.slane %v394, 2
      %v396 = vadd.f32 %v394, %v395
      %v397 = vrot.slane %v396, 1
      %v398 = vadd.f32 %v396, %v397
      %v399 = vsel %vm244, %v218, 0.0
      %v400 = vrot.slane %v399, 4
      %v401 = vadd.f32 %v399, %v400
      %v402 = vrot.slane %v401, 2
      %v403 = vadd.f32 %v401, %v402
      %v404 = vrot.slane %v403, 1
      %v405 = vadd.f32 %v403, %v404
      %v406 = vsel %vm244, %v219, 0.0
      %v407 = vrot.slane %v406, 4
      %v408 = vadd.f32 %v406, %v407
      %v409 = vrot.slane %v408, 2
      %v410 = vadd.f32 %v408, %v409
      %v411 = vrot.slane %v410, 1
      %v412 = vadd.f32 %v410, %v411
      %v413 = vadd.f32 %v251, 0.0
      %v414 = vadd.f32 %v258, 0.0
      %v415 = vadd.f32 %v265, 0.0
      %v416 = vadd.f32 %v272, 0.0
      %v417 = vadd.f32 %v279, 0.0
      %v418 = vadd.f32 %v286, 0.0
      %v419 = vadd.f32 %v293, 0.0
      %v420 = vadd.f32 %v300, 0.0
      %v421 = vadd.f32 %v307, 0.0
      %v422 = vadd.f32 %v314, 0.0
      %v423 = vadd.f32 %v321, 0.0
      %v424 = vadd.f32 %v328, 0.0
      %v425 = vadd.f32 %v335, 0.0
      %v426 = vadd.f32 %v342, 0.0
      %v427 = vadd.f32 %v349, 0.0
      %v428 = vadd.f32 %v356, 0.0
      %v429 = vadd.f32 %v363, 0.0
      %v430 = vadd.f32 %v370, 0.0
      %v431 = vadd.f32 %v377, 0.0
      %v432 = vadd.f32 %v384, 0.0
      %v433 = vadd.f32 %v391, 0.0
      %v434 = vadd.f32 %v398, 0.0
      %v435 = vadd.f32 %v405, 0.0
      %v436 = vadd.f32 %v412, 0.0
      %v437 = vmul.f32 %v413, 0.25
      %v438 = vmul.f32 %v414, 0.25
      %v439 = vmul.f32 %v415, 0.25
      %v440 = vmul.f32 %v416, 0.25
      %v441 = vmul.f32 %v417, 0.25
      %v442 = vmul.f32 %v418, 0.25
      %v443 = vmul.f32 %v419, 0.25
      %v444 = vmul.f32 %v420, 0.25
      %v445 = vmul.f32 %v421, 0.25
      %v446 = vmul.f32 %v422, 0.25
      %v447 = vmul.f32 %v423, 0.25
      %v448 = vmul.f32 %v424, 0.25
      %v449 = vmul.f32 %v425, 0.25
      %v450 = vmul.f32 %v426, 0.25
      %v451 = vmul.f32 %v427, 0.25
      %v452 = vmul.f32 %v428, 0.25
      %v453 = vmul.f32 %v429, 0.25
      %v454 = vmul.f32 %v430, 0.25
      %v455 = vmul.f32 %v431, 0.25
      %v456 = vmul.f32 %v432, 0.25
      %v457 = vmul.f32 %v433, 0.25
      %v458 = vmul.f32 %v434, 0.25
      %v459 = vmul.f32 %v435, 0.25
      %v460 = vmul.f32 %v436, 0.25
      %vm485 = vcmask 1041409
      %v486 = vsel %vm485, %v439, %v437
      %vm487 = vcmask 1042434
      %v488 = vsel %vm487, %v441, %v486
      %v489 = vsel %vm485, %v440, %v438
      %v490 = vsel %vm487, %v442, %v489
      %v491 = vsel %vm485, %v445, %v443
      %v492 = vsel %vm487, %v447, %v491
      %v493 = vsel %vm485, %v446, %v444
      %v494 = vsel %vm487, %v448, %v493
      %v495 = vsel %vm485, %v451, %v449
      %v496 = vsel %vm487, %v453, %v495
      %v497 = vsel %vm485, %v452, %v450
      %v498 = vsel %vm487, %v454, %v497
      %v499 = vsel %vm485, %v457, %v455
      %v500 = vsel %vm487, %v459, %v499
      %v501 = vsel %vm485, %v458, %v456
      %v502 = vsel %vm487, %v460, %v501
      %vm511 = vcmask 1042432
      %v512 = vsel %vm511, %v488, inf
      %v513 = vsel %vm511, %v490, inf
      %v514 = vmin.f32 %v512, %v513
      %515 = vmin.xlane.f32.xlu0 %v514
      %v516 = vpop.xlane.xlu0 %515
      %v517 = vsel %vm511, %v492, inf
      %v518 = vsel %vm511, %v494, inf
      %v519 = vmin.f32 %v517, %v518
      %520 = vmin.xlane.f32.xlu0 %v519
      %v521 = vpop.xlane.xlu0 %520
      %v522 = vsel %vm511, %v496, inf
      %v523 = vsel %vm511, %v498, inf
      %v524 = vmin.f32 %v522, %v523
      %525 = vmin.xlane.f32.xlu0 %v524
      %v526 = vpop.xlane.xlu0 %525
      %v527 = vsel %vm511, %v500, inf
      %v528 = vsel %vm511, %v502, inf
      %v529 = vmin.f32 %v527, %v528
      %530 = vmin.xlane.f32.xlu0 %v529
      %v531 = vpop.xlane.xlu0 %530
      %v536 = vrot.slane %v516, 1
      %v537 = vrot.slane %v516, 2
      %v538 = vrot.slane %v521, 1
      %v539 = vrot.slane %v521, 2
      %v540 = vrot.slane %v526, 1
      %v541 = vrot.slane %v526, 2
      %v542 = vrot.slane %v531, 1
      %v543 = vrot.slane %v531, 2
      %v556 = vsub.f32 %v437, %v516
      %v557 = vsub.f32 %v438, %v516
      %v558 = vsub.f32 %v439, %v536
      %v559 = vsub.f32 %v440, %v536
      %v560 = vsub.f32 %v441, %v537
      %v561 = vsub.f32 %v442, %v537
      %v562 = vsub.f32 %v443, %v521
      %v563 = vsub.f32 %v444, %v521
      %v564 = vsub.f32 %v445, %v538
      %v565 = vsub.f32 %v446, %v538
      %v566 = vsub.f32 %v447, %v539
      %v567 = vsub.f32 %v448, %v539
      %v568 = vsub.f32 %v449, %v526
      %v569 = vsub.f32 %v450, %v526
      %v570 = vsub.f32 %v451, %v540
      %v571 = vsub.f32 %v452, %v540
      %v572 = vsub.f32 %v453, %v541
      %v573 = vsub.f32 %v454, %v541
      %v574 = vsub.f32 %v455, %v531
      %v575 = vsub.f32 %v456, %v531
      %v576 = vsub.f32 %v457, %v542
      %v577 = vsub.f32 %v458, %v542
      %v578 = vsub.f32 %v459, %v543
      %v579 = vsub.f32 %v460, %v543
      %v604 = vrot.slane %v558, 7
      %v605 = vsel %vm485, %v604, %v556
      %v606 = vrot.slane %v560, 6
      %v607 = vsel %vm487, %v606, %v605
      %v608 = vrot.slane %v559, 7
      %v609 = vsel %vm485, %v608, %v557
      %v610 = vrot.slane %v561, 6
      %v611 = vsel %vm487, %v610, %v609
      %v612 = vrot.slane %v564, 7
      %v613 = vsel %vm485, %v612, %v562
      %v614 = vrot.slane %v566, 6
      %v615 = vsel %vm487, %v614, %v613
      %v616 = vrot.slane %v565, 7
      %v617 = vsel %vm485, %v616, %v563
      %v618 = vrot.slane %v567, 6
      %v619 = vsel %vm487, %v618, %v617
      %v620 = vrot.slane %v570, 7
      %v621 = vsel %vm485, %v620, %v568
      %v622 = vrot.slane %v572, 6
      %v623 = vsel %vm487, %v622, %v621
      %v624 = vrot.slane %v571, 7
      %v625 = vsel %vm485, %v624, %v569
      %v626 = vrot.slane %v573, 6
      %v627 = vsel %vm487, %v626, %v625
      %v628 = vrot.slane %v576, 7
      %v629 = vsel %vm485, %v628, %v574
      %v630 = vrot.slane %v578, 6
      %v631 = vsel %vm487, %v630, %v629
      %v632 = vrot.slane %v577, 7
      %v633 = vsel %vm485, %v632, %v575
      %v634 = vrot.slane %v579, 6
      %v635 = vsel %vm487, %v634, %v633
      %v644 = vsel %vm511, %v607, -inf
      %v645 = vsel %vm511, %v611, -inf
      %v646 = vmax.f32 %v644, %v645
      %647 = vmax.xlane.f32.xlu0 %v646
      %v648 = vpop.xlane.xlu0 %647
      %v649 = vsel %vm511, %v615, -inf
      %v650 = vsel %vm511, %v619, -inf
      %v651 = vmax.f32 %v649, %v650
      %652 = vmax.xlane.f32.xlu0 %v651
      %v653 = vpop.xlane.xlu0 %652
      %v654 = vsel %vm511, %v623, -inf
      %v655 = vsel %vm511, %v627, -inf
      %v656 = vmax.f32 %v654, %v655
      %657 = vmax.xlane.f32.xlu0 %v656
      %v658 = vpop.xlane.xlu0 %657
      %v659 = vsel %vm511, %v631, -inf
      %v660 = vsel %vm511, %v635, -inf
      %v661 = vmax.f32 %v659, %v660
      %662 = vmax.xlane.f32.xlu0 %v661
      %v663 = vpop.xlane.xlu0 %662
      %v664 = vrcp.pop %v648
      %v665 = vmul.f32 %v648, %v664
      %v666 = vsub.f32 1.0, %v665
      %v667 = vmul.f32 %v664, %v666
      %v668 = vadd.f32 %v664, %v667
      %vm669 = vweird.f32 %v648
      %vm670 = vweird.f32 %v664
      %vm671 = vmor %vm669, %vm670
      %v672 = vsel %vm671, %v664, %v668
      %v673 = vand.u32 2147483647, %v648
      %vm674 = vcmp.eq.f32.partialorder %v673, 8.507059e+37
      %v675 = vand.u32 %v648, 2147483648
      %v676 = vor.u32 1.1754944e-38, %v675
      %v677 = vsel %vm674, %v676, %v672
      %v678 = vrcp.pop %v653
      %v679 = vmul.f32 %v653, %v678
      %v680 = vsub.f32 1.0, %v679
      %v681 = vmul.f32 %v678, %v680
      %v682 = vadd.f32 %v678, %v681
      %vm683 = vweird.f32 %v653
      %vm684 = vweird.f32 %v678
      %vm685 = vmor %vm683, %vm684
      %v686 = vsel %vm685, %v678, %v682
      %v687 = vand.u32 2147483647, %v653
      %vm688 = vcmp.eq.f32.partialorder %v687, 8.507059e+37
      %v689 = vand.u32 %v653, 2147483648
      %v690 = vor.u32 1.1754944e-38, %v689
      %v691 = vsel %vm688, %v690, %v686
      %v692 = vrcp.pop %v658
      %v693 = vmul.f32 %v658, %v692
      %v694 = vsub.f32 1.0, %v693
      %v695 = vmul.f32 %v692, %v694
      %v696 = vadd.f32 %v692, %v695
      %vm697 = vweird.f32 %v658
      %vm698 = vweird.f32 %v692
      %vm699 = vmor %vm697, %vm698
      %v700 = vsel %vm699, %v692, %v696
      %v701 = vand.u32 2147483647, %v658
      %vm702 = vcmp.eq.f32.partialorder %v701, 8.507059e+37
      %v703 = vand.u32 %v658, 2147483648
      %v704 = vor.u32 1.1754944e-38, %v703
      %v705 = vsel %vm702, %v704, %v700
      %v706 = vrcp.pop %v663
      %v707 = vmul.f32 %v663, %v706
      %v708 = vsub.f32 1.0, %v707
      %v709 = vmul.f32 %v706, %v708
      %v710 = vadd.f32 %v706, %v709
      %vm711 = vweird.f32 %v663
      %vm712 = vweird.f32 %v706
      %vm713 = vmor %vm711, %vm712
      %v714 = vsel %vm713, %v706, %v710
      %v715 = vand.u32 2147483647, %v663
      %vm716 = vcmp.eq.f32.partialorder %v715, 8.507059e+37
      %v717 = vand.u32 %v663, 2147483648
      %v718 = vor.u32 1.1754944e-38, %v717
      %v719 = vsel %vm716, %v718, %v714
      %v724 = vrot.slane %v677, 1
      %v725 = vrot.slane %v677, 2
      %v726 = vrot.slane %v691, 1
      %v727 = vrot.slane %v691, 2
      %v728 = vrot.slane %v705, 1
      %v729 = vrot.slane %v705, 2
      %v730 = vrot.slane %v719, 1
      %v731 = vrot.slane %v719, 2
      %v744 = vmul.f32 %v556, %v677
      %v745 = vmul.f32 %v557, %v677
      %v746 = vmul.f32 %v558, %v724
      %v747 = vmul.f32 %v559, %v724
      %v748 = vmul.f32 %v560, %v725
      %v749 = vmul.f32 %v561, %v725
      %v750 = vmul.f32 %v562, %v691
      %v751 = vmul.f32 %v563, %v691
      %v752 = vmul.f32 %v564, %v726
      %v753 = vmul.f32 %v565, %v726
      %v754 = vmul.f32 %v566, %v727
      %v755 = vmul.f32 %v567, %v727
      %v756 = vmul.f32 %v568, %v705
      %v757 = vmul.f32 %v569, %v705
      %v758 = vmul.f32 %v570, %v728
      %v759 = vmul.f32 %v571, %v728
      %v760 = vmul.f32 %v572, %v729
      %v761 = vmul.f32 %v573, %v729
      %v762 = vmul.f32 %v574, %v719
      %v763 = vmul.f32 %v575, %v719
      %v764 = vmul.f32 %v576, %v730
      %v765 = vmul.f32 %v577, %v730
      %v766 = vmul.f32 %v578, %v731
      %v767 = vmul.f32 %v579, %v731
      %v792 = vrot.slane %v746, 7
      %v793 = vsel %vm485, %v792, %v744
      %v794 = vrot.slane %v748, 6
      %v795 = vsel %vm487, %v794, %v793
      %v796 = vrot.slane %v747, 7
      %v797 = vsel %vm485, %v796, %v745
      %v798 = vrot.slane %v749, 6
      %v799 = vsel %vm487, %v798, %v797
      %v800 = vrot.slane %v752, 7
      %v801 = vsel %vm485, %v800, %v750
      %v802 = vrot.slane %v754, 6
      %v803 = vsel %vm487, %v802, %v801
      %v804 = vrot.slane %v753, 7
      %v805 = vsel %vm485, %v804, %v751
      %v806 = vrot.slane %v755, 6
      %v807 = vsel %vm487, %v806, %v805
      %v808 = vrot.slane %v758, 7
      %v809 = vsel %vm485, %v808, %v756
      %v810 = vrot.slane %v760, 6
      %v811 = vsel %vm487, %v810, %v809
      %v812 = vrot.slane %v759, 7
      %v813 = vsel %vm485, %v812, %v757
      %v814 = vrot.slane %v761, 6
      %v815 = vsel %vm487, %v814, %v813
      %v816 = vrot.slane %v764, 7
      %v817 = vsel %vm485, %v816, %v762
      %v818 = vrot.slane %v766, 6
      %v819 = vsel %vm487, %v818, %v817
      %v820 = vrot.slane %v765, 7
      %v821 = vsel %vm485, %v820, %v763
      %v822 = vrot.slane %v767, 6
      %v823 = vsel %vm487, %v822, %v821
      %v832 = vsel %vm511, %v795, 0.0
      %v833 = vrot.slane %v832, 4
      %v834 = vadd.f32 %v832, %v833
      %v835 = vrot.slane %v834, 2
      %v836 = vadd.f32 %v834, %v835
      %v837 = vrot.slane %v836, 1
      %v838 = vadd.f32 %v836, %v837
      %v839 = vsel %vm511, %v799, 0.0
      %v840 = vrot.slane %v839, 4
      %v841 = vadd.f32 %v839, %v840
      %v842 = vrot.slane %v841, 2
      %v843 = vadd.f32 %v841, %v842
      %v844 = vrot.slane %v843, 1
      %v845 = vadd.f32 %v843, %v844
      %v846 = vsel %vm511, %v803, 0.0
      %v847 = vrot.slane %v846, 4
      %v848 = vadd.f32 %v846, %v847
      %v849 = vrot.slane %v848, 2
      %v850 = vadd.f32 %v848, %v849
      %v851 = vrot.slane %v850, 1
      %v852 = vadd.f32 %v850, %v851
      %v853 = vsel %vm511, %v807, 0.0
      %v854 = vrot.slane %v853, 4
      %v855 = vadd.f32 %v853, %v854
      %v856 = vrot.slane %v855, 2
      %v857 = vadd.f32 %v855, %v856
      %v858 = vrot.slane %v857, 1
      %v859 = vadd.f32 %v857, %v858
      %v860 = vsel %vm511, %v811, 0.0
      %v861 = vrot.slane %v860, 4
      %v862 = vadd.f32 %v860, %v861
      %v863 = vrot.slane %v862, 2
      %v864 = vadd.f32 %v862, %v863
      %v865 = vrot.slane %v864, 1
      %v866 = vadd.f32 %v864, %v865
      %v867 = vsel %vm511, %v815, 0.0
      %v868 = vrot.slane %v867, 4
      %v869 = vadd.f32 %v867, %v868
      %v870 = vrot.slane %v869, 2
      %v871 = vadd.f32 %v869, %v870
      %v872 = vrot.slane %v871, 1
      %v873 = vadd.f32 %v871, %v872
      %v874 = vsel %vm511, %v819, 0.0
      %v875 = vrot.slane %v874, 4
      %v876 = vadd.f32 %v874, %v875
      %v877 = vrot.slane %v876, 2
      %v878 = vadd.f32 %v876, %v877
      %v879 = vrot.slane %v878, 1
      %v880 = vadd.f32 %v878, %v879
      %v881 = vsel %vm511, %v823, 0.0
      %v882 = vrot.slane %v881, 4
      %v883 = vadd.f32 %v881, %v882
      %v884 = vrot.slane %v883, 2
      %v885 = vadd.f32 %v883, %v884
      %v886 = vrot.slane %v885, 1
      %v887 = vadd.f32 %v885, %v886
      %v888 = vmul.f32 %v838, 0.33333334
      %v889 = vmul.f32 %v845, 0.33333334
      %v890 = vmul.f32 %v852, 0.33333334
      %v891 = vmul.f32 %v859, 0.33333334
      %v892 = vmul.f32 %v866, 0.33333334
      %v893 = vmul.f32 %v873, 0.33333334
      %v894 = vmul.f32 %v880, 0.33333334
      %v895 = vmul.f32 %v887, 0.33333334
      %v904 = vrot.slane %v889, 7
      %v905 = vrot.slane %v891, 7
      %v906 = vrot.slane %v893, 7
      %v907 = vrot.slane %v895, 7
      %vm908 = vcmask 1040384
      %v909 = vsel %vm908, %v888, %v904
      %v910 = vsel %vm908, %v890, %v905
      %v911 = vsel %vm908, %v892, %v906
      %v912 = vsel %vm908, %v894, %v907
      %v917 = vlaneseq
      %vm918 = vcmp.ge.s32.totalorder %v917, 0
      %vm919 = vcmp.lt.s32.totalorder %v917, 256
      %vm920 = vmand %vm918, %vm919
      %921 = vst.msk [vmem:[%s148] sm:$0x3] %vm920, %v909
      %922 = vst.msk [vmem:[%s148 + $0x2] sm:$0x3] %vm920, %v910
      %923 = vst.msk [vmem:[%s148 + $0x4] sm:$0x3] %vm920, %v911
      %924 = vst.msk [vmem:[%s148 + $0x6] sm:$0x3] %vm920, %v912
      %s925 = smul.u32 4, %s13
      %p926 = scmp.lt.s32.totalorder %s925, 7
      %s927 = scalar_select %p926, %s925, 7
      %s928 = smul.addr %s927, 2
      %s929 = scalar_lea.vmem %s2, %s928
      // Predicated region
      $region29: #{spatial_attention_block_p.1} parent=27 // pred_check
        %p930 = pneg %p78
      $region30: #{spatial_attention_block_p.1} parent=27 // pred_check_branch
        %932 = sbr.rel (%p930) target = $region32
      $region31: #{spatial_attention_block_p.1} parent=27 // pred_region
        %s933 = smul.u32 4, %s13
      $region32: #{spatial_attention_block_p.1} parent=27 // pred_fallthru
        _
    $region28: #{spatial_attention_block_p.1} parent=5 // pred_fallthru
      _
    %p934 = scmp.le.s32.totalorder 2, %s8
    // Predicated region
    $region33: #{spatial_attention_block_p.1} parent=5 // pred_check
      %p935 = pneg %p934
    $region34: #{spatial_attention_block_p.1} parent=5 // pred_check_branch
      %937 = sbr.rel (%p935) target = $region36
    $region35: #{spatial_attention_block_p.1} parent=5 // pred_region
      %s938 = ssub.s32 %s8, 2
      // Predicated region
      $region37: #{spatial_attention_block_p.1} parent=35 // pred_check
        %p939 = pneg %p84
      $region38: #{spatial_attention_block_p.1} parent=35 // pred_check_branch
        %941 = sbr.rel (%p939) target = $region40
      $region39: #{spatial_attention_block_p.1} parent=35 // pred_region
        %s942 = smul.u32 4, %s14
        %p943 = scmp.lt.s32.totalorder %s942, 7
        %s944 = scalar_select %p943, %s942, 7
        %s945 = smul.addr %s944, 2
        %s946 = scalar_lea.vmem %s2, %s945
      $region40: #{spatial_attention_block_p.1} parent=35 // pred_fallthru
        _
    $region36: #{spatial_attention_block_p.1} parent=5 // pred_fallthru
      _
  $region6: #{spatial_attention_block_p.1} parent=0 // loop_footer
    %s12 = sadd.s32 1, %s8
  $region7: #{spatial_attention_block_p.1} parent=0 // loop_footer_branch
    %7 = sbr.rel target = $region3
  $region8: #{spatial_attention_block_p.1} parent=0 // loop_exit
    _

</llo_original>
